<compile_context>
chip_gen: v7x
topology: tpu7x:2x2x1
jax: 0.10.0
libtpu: 0.0.40
codegen_flags: <defaults>
</compile_context>

<pallas_src>
import functools

import jax
import jax.numpy as jnp
from jax.experimental import pallas as pl
from jax.experimental.pallas import tpu as pltpu


# tanh-approximate GELU (EUP tanh slot; VPU muls hide under the MXU).
# TODO(synk): PyTorch nn.GELU() default is the exact erf form; tanh approx used here.
_SQRT_2_OVER_PI = 0.7978845608028654
_GELU_COEFF = 0.044715


def _gelu_tanh(x):
    x3 = x * x * x
    return 0.5 * x * (1.0 + jnp.tanh(_SQRT_2_OVER_PI * (x + _GELU_COEFF * x3)))


def _round_up(v, m):
    return ((v + m - 1) // m) * m


# ----------------------------------------------------------------------------
# Kernels
# ----------------------------------------------------------------------------

def _ff_resident_kernel(x_ref, w1_ref, b1_ref, w2_ref, b2_ref, o_ref):
    # Row tile of activations; full weights resident in VMEM (constant index_map,
    # single-buffered when supported).  MXU consumes the narrow compute dtype
    # directly and accumulates in f32; bias + GELU elementwise math is f32.
    x = x_ref[...]
    h = jnp.dot(x, w1_ref[...], preferred_element_type=jnp.float32)
    h = _gelu_tanh(h + b1_ref[...].astype(jnp.float32))
    h = h.astype(w2_ref.dtype)                      # keep the second matmul in bf16
    y = jnp.dot(h, w2_ref[...], preferred_element_type=jnp.float32)
    o_ref[...] = (y + b2_ref[...].astype(jnp.float32)).astype(o_ref.dtype)


def _ff_htiled_kernel(x_ref, w1_ref, b1_ref, w2_ref, b2_ref, o_ref, acc_ref):
    # Grid = (row tiles, H tiles).  W1 column tiles / W2 row tiles stream
    # through VMEM; the f32 output accumulator stays resident across the
    # (last, "arbitrary") H axis.  GELU is columnwise, so summing the partial
    # GELU(x@W1_j + b1_j) @ W2_j over H tiles equals the full FFN.
    j = pl.program_id(1)

    @pl.when(j == 0)
    def _():
        acc_ref[...] = jnp.zeros_like(acc_ref)

    h = jnp.dot(x_ref[...], w1_ref[...], preferred_element_type=jnp.float32)
    h = _gelu_tanh(h + b1_ref[...].astype(jnp.float32))
    h = h.astype(w2_ref.dtype)
    acc_ref[...] += jnp.dot(h, w2_ref[...], preferred_element_type=jnp.float32)

    @pl.when(j == pl.num_programs(1) - 1)
    def _():
        o_ref[...] = (acc_ref[...] + b2_ref[...].astype(jnp.float32)).astype(o_ref.dtype)


# ----------------------------------------------------------------------------
# Hardware / feature probes
# ----------------------------------------------------------------------------

@functools.lru_cache(maxsize=None)
def _single_buffer_mode():
    """Return pl.Buffered(1) if single-buffered grid-invariant operands are
    supported by this JAX/Mosaic build, else None (probed with a tiny kernel
    so the main pallas_call never fails)."""
    try:
        mode = pl.Buffered(1)
    except Exception:
        return None

    def probe(x_ref, w_ref, o_ref):
        o_ref[...] = x_ref[...] + w_ref[...]

    try:
        fn = pl.pallas_call(
            probe,
            out_shape=jax.ShapeDtypeStruct((16, 128), jnp.float32),
            grid=(2,),
            in_specs=[
                pl.BlockSpec((8, 128), lambda i: (i, 0)),
                pl.BlockSpec((8, 128), lambda i: (0, 0), pipeline_mode=mode),
            ],
            out_specs=pl.BlockSpec((8, 128), lambda i: (i, 0)),
        )
        jax.block_until_ready(
            fn(jnp.zeros((16, 128), jnp.float32), jnp.zeros((8, 128), jnp.float32)))
        return mode
    except Exception:
        return None


def _vmem_capacity_bytes():
    try:
        cap = getattr(pltpu.get_tpu_info(), "vmem_capacity_bytes", None)
        if cap:
            return int(cap)
    except Exception:
        pass
    return 64 << 20  # conservative fallback: v7x per-TensorCore VMEM


# ----------------------------------------------------------------------------
# VMEM sizing / plan selection
# ----------------------------------------------------------------------------

def _resident_bytes(rt, D, H, act_b, w_b, out_b, w_copies):
    io = 2 * rt * D * act_b + 2 * rt * D * out_b          # double-buffered x-in + out
    wts = w_copies * (D * H + H * D) * w_b + w_copies * (H + D) * 4
    interm = rt * H * (4 + w_b) + rt * D * 4              # live f32 / bf16 h, f32 y
    return io + wts + interm


def _htiled_bytes(rt, ht, D, act_b, w_b, out_b):
    io = 2 * rt * D * act_b + 2 * rt * D * out_b
    wts = 2 * (D * ht + ht * D) * w_b + 2 * (ht + D) * 4  # streamed, double-buffered
    acc = rt * D * 4                                      # f32 accumulator scratch
    interm = rt * ht * (4 + w_b)
    return io + wts + acc + interm


def _choose_plan(rows, D, H, act_b, w_b, out_b, budget, w_copies, h_tile):
    rows8 = max(8, _round_up(rows, 8))
    max_rt = min(2048, rows8)                             # grow toward budget, then shrink

    def shrink(rt, floor):
        return max(floor, ((rt // 2) // 8) * 8)

    if h_tile is None:
        rt = max_rt
        while rt > 256 and _resident_bytes(rt, D, H, act_b, w_b, out_b, w_copies) > budget:
            rt = shrink(rt, 256)
        if _resident_bytes(rt, D, H, act_b, w_b, out_b, w_copies) <= budget:
            return "resident", rt, H
        # Resident weights don't fit (e.g. v7x 64 MiB with large H): stream H tiles.
        candidates = [ht for ht in (1024, 512, 256, 128) if H % ht == 0]
        if not candidates:
            # TODO(synk): H not a multiple of 128 -> no clean H tiling; best-effort resident.
            return "resident", rt, H
    else:
        assert H % h_tile == 0 and (h_tile % 128 == 0 or h_tile == H), (
            "h_tile must divide H and be a multiple of 128 (or equal H)")
        if h_tile == H:
            return "resident", max_rt, H
        candidates = [h_tile]

    for ht in candidates:
        rt = max_rt
        while rt > 64 and _htiled_bytes(rt, ht, D, act_b, w_b, out_b) > budget:
            rt = shrink(rt, 64)
        if _htiled_bytes(rt, ht, D, act_b, w_b, out_b) <= budget:
            return "htiled", rt, ht
    return "htiled", 64, candidates[-1]                   # best effort


# ----------------------------------------------------------------------------
# Wrapper
# ----------------------------------------------------------------------------

def chunk_forward(x, w1, b1, w2, b2, *, chunks, local_prev=None, fast_prev=None,
                  compute_dtype=jnp.bfloat16, out_dtype=None, h_tile=None,
                  x_buffer_count=None):
    """Pallas implementation of Chunk(chunks, FeedForward, along_dim=1).forward.

    `chunks` is accepted for API parity with the PyTorch module; since the
    wrapped FeedForward is row-wise, chunk + cat along dim 1 is a numerical
    no-op, so the tile size is chosen for the hardware, not from `chunks`.
    """
    assert chunks >= 1
    B, N, D = x.shape
    H = w1.shape[1]
    rows = B * N

    out_dtype = x.dtype if out_dtype is None else out_dtype

    # Feed the MXU narrow operands (bf16 by default) with f32 accumulation.
    # For a bf16 model these casts are no-ops; biases stay f32 (added in f32).
    xc = x.reshape(rows, D).astype(compute_dtype)          # reshape is free
    w1c = w1.astype(compute_dtype)
    w2c = w2.astype(compute_dtype)
    b1c = b1.astype(jnp.float32).reshape(1, H)
    b2c = b2.astype(jnp.float32).reshape(1, D)

    act_b = jnp.dtype(compute_dtype).itemsize
    w_b = act_b
    out_b = jnp.dtype(out_dtype).itemsize

    single_buf = _single_buffer_mode()
    w_copies = 1 if single_buf is not None else 2

    cap = _vmem_capacity_bytes()
    budget = int(0.75 * cap)          # ~96 MiB on v5e/v6e, ~48 MiB on v7x

    mode, row_tile, ht = _choose_plan(rows, D, H, act_b, w_b, out_b, budget,
                                      w_copies, h_tile)

    n_row_tiles = pl.cdiv(rows, row_tile)  # ragged last tile: Pallas masks OOB stores

    x_mode = None
    if x_buffer_count is not None and single_buf is not None:
        x_mode = pl.Buffered(x_buffer_count)   # optional deeper x pipelining

    def spec(shape, index_map, resident=False):
        if resident and single_buf is not None:
            return pl.BlockSpec(shape, index_map, pipeline_mode=single_buf)
        return pl.BlockSpec(shape, index_map)

    def x_spec(shape, index_map):
        if x_mode is not None:
            return pl.BlockSpec(shape, index_map, pipeline_mode=x_mode)
        return pl.BlockSpec(shape, index_map)

    if mode == "resident":
        grid = (n_row_tiles,)
        in_specs = [
            x_spec((row_tile, D), lambda i: (i, 0)),            # x row tile
            spec((D, H), lambda i: (0, 0), resident=True),      # W1 (resident)
            spec((1, H), lambda i: (0, 0), resident=True),      # b1
            spec((H, D), lambda i: (0, 0), resident=True),      # W2 (resident)
            spec((1, D), lambda i: (0, 0), resident=True),      # b2
        ]
        out_spec = pl.BlockSpec((row_tile, D), lambda i: (i, 0))
        scratch = []
        kernel = _ff_resident_kernel
        dim_sems = ("parallel",)
        vmem_need = _resident_bytes(row_tile, D, H, act_b, w_b, out_b, w_copies)
    else:
        grid = (n_row_tiles, H // ht)
        in_specs = [
            x_spec((row_tile, D), lambda i, j: (i, 0)),          # x (resident per row tile)
            spec((D, ht), lambda i, j: (0, j)),                  # W1 column tile (streamed)
            spec((1, ht), lambda i, j: (0, j)),                  # b1 tile
            spec((ht, D), lambda i, j: (j, 0)),                  # W2 row tile (streamed)
            spec((1, D), lambda i, j: (0, 0), resident=True),    # b2
        ]
        out_spec = pl.BlockSpec((row_tile, D), lambda i, j: (i, 0))
        scratch = [pltpu.VMEM((row_tile, D), jnp.float32)]       # f32 accumulator
        kernel = _ff_htiled_kernel
        dim_sems = ("parallel", "arbitrary")
        vmem_need = _htiled_bytes(row_tile, ht, D, act_b, w_b, out_b)

    # Cap the request at physical VMEM (never 128 MiB on v7x).
    vmem_limit = int(min(cap, max(vmem_need + (4 << 20), 32 << 20)))

    out = pl.pallas_call(
        kernel,
        out_shape=jax.ShapeDtypeStruct((rows, D), out_dtype),
        grid_spec=pltpu.PrefetchScalarGridSpec(
            num_scalar_prefetch=0,
            grid=grid,
            in_specs=in_specs,
            out_specs=out_spec,
            scratch_shapes=scratch,
        ),
        compiler_params=pltpu.CompilerParams(
            dimension_semantics=dim_sems,
            vmem_limit_bytes=vmem_limit,
        ),
    )(xc, w1c, b1c, w2c, b2c)

    # No row/lane padding was added -> no slice; reshape back is free.
    return out.reshape(B, N, D), local_prev, fast_prev


# ----------------------------------------------------------------------------
# Pure-JAX reference (mirrors the PyTorch chunk / apply-FF / cat semantics)
# ----------------------------------------------------------------------------

def chunk_forward_reference(x, w1, b1, w2, b2, *, chunks, compute_dtype=None):
    cd = x.dtype if compute_dtype is None else compute_dtype

    def ff(c):
        h = jnp.dot(c.reshape(-1, c.shape[-1]).astype(cd), w1.astype(cd),
                    preferred_element_type=jnp.float32)
        h = _gelu_tanh(h + b1.astype(jnp.float32)).astype(cd)
        y = jnp.dot(h, w2.astype(cd), preferred_element_type=jnp.float32)
        y = y + b2.astype(jnp.float32)
        return y.reshape(c.shape).astype(x.dtype)

    if chunks == 1:
        return ff(x)
    pieces = jnp.array_split(x, chunks, axis=1)
    return jnp.concatenate([ff(p) for p in pieces], axis=1)


if __name__ == "__main__":
    key = jax.random.PRNGKey(0)
    kx, k1, k2, k3, k4 = jax.random.split(key, 5)

    B, N = 2, 16
    CHUNKS = 2

    # --- Case 1: tiny shapes, resident-weight path --------------------------
    D, H = 32, 64
    x = jax.random.normal(kx, (B, N, D), dtype=jnp.float32)
    w1 = jax.random.normal(k1, (D, H), dtype=jnp.float32) * (1.0 / jnp.sqrt(D))
    b1 = jax.random.normal(k2, (H,), dtype=jnp.float32) * 0.02
    w2 = jax.random.normal(k3, (H, D), dtype=jnp.float32) * (1.0 / jnp.sqrt(H))
    b2 = jax.random.normal(k4, (D,), dtype=jnp.float32) * 0.02

    fwd = jax.jit(functools.partial(chunk_forward, chunks=CHUNKS))
    out, lp, fp = fwd(x, w1, b1, w2, b2)
    out = jax.block_until_ready(out)

    ref = chunk_forward_reference(x, w1, b1, w2, b2, chunks=CHUNKS,
                                  compute_dtype=jnp.bfloat16)
    ref_f32 = chunk_forward_reference(x, w1, b1, w2, b2, chunks=CHUNKS)
    assert out.shape == (B, N, D) and out.dtype == x.dtype
    assert lp is None and fp is None
    assert jnp.allclose(out, ref, atol=5e-3, rtol=5e-3), float(jnp.max(jnp.abs(out - ref)))
    assert jnp.allclose(out, ref_f32, atol=1e-1, rtol=1e-1)   # bf16-vs-f32 sanity bound

    # --- Case 2: force the H-tiled accumulator path (v7x-style streaming) ---
    D2, H2 = 128, 256
    x2 = jax.random.normal(kx, (B, N, D2), dtype=jnp.float32)
    w1_2 = jax.random.normal(k1, (D2, H2), dtype=jnp.float32) * (1.0 / jnp.sqrt(D2))
    b1_2 = jax.random.normal(k2, (H2,), dtype=jnp.float32) * 0.02
    w2_2 = jax.random.normal(k3, (H2, D2), dtype=jnp.float32) * (1.0 / jnp.sqrt(H2))
    b2_2 = jax.random.normal(k4, (D2,), dtype=jnp.float32) * 0.02

    fwd2 = jax.jit(functools.partial(chunk_forward, chunks=CHUNKS, h_tile=128))
    out2, _, _ = fwd2(x2, w1_2, b1_2, w2_2, b2_2)
    out2 = jax.block_until_ready(out2)

    ref2 = chunk_forward_reference(x2, w1_2, b1_2, w2_2, b2_2, chunks=CHUNKS,
                                   compute_dtype=jnp.bfloat16)
    assert jnp.allclose(out2, ref2, atol=5e-3, rtol=5e-3), \
        float(jnp.max(jnp.abs(out2 - ref2)))

    print("KERNEL_OK")
</pallas_src>

<mosaic_0001>
module attributes {stable_mosaic.version = 11 : i64} {
  func.func @_ff_resident_kernel(%arg0: i32, %arg1: memref<32x32xbf16, #tpu.memory_space<vmem>>, %arg2: memref<32x64xbf16, #tpu.memory_space<vmem>>, %arg3: memref<1x64xf32, #tpu.memory_space<vmem>>, %arg4: memref<64x32xbf16, #tpu.memory_space<vmem>>, %arg5: memref<1x32xf32, #tpu.memory_space<vmem>>, %arg6: memref<32x32xf32, #tpu.memory_space<vmem>>) attributes {dimension_semantics = [#tpu.dimension_semantics<parallel>], iteration_bounds = array<i64: 1>, scalar_prefetch = 0 : i64, scratch_operands = 0 : i64, tpu.core_type = #tpu.core_type<tc>, window_params = [{transform_indices = @transform_0, window_bounds = array<i64: 32, 32>}, {pipeline_mode = #tpu.pipeline_mode<synchronous>, transform_indices = @transform_1, window_bounds = array<i64: 32, 64>}, {pipeline_mode = #tpu.pipeline_mode<synchronous>, transform_indices = @transform_2, window_bounds = array<i64: 1, 64>}, {pipeline_mode = #tpu.pipeline_mode<synchronous>, transform_indices = @transform_3, window_bounds = array<i64: 64, 32>}, {pipeline_mode = #tpu.pipeline_mode<synchronous>, transform_indices = @transform_4, window_bounds = array<i64: 1, 32>}, {transform_indices = @transform_5, window_bounds = array<i64: 32, 32>}]} {
    %c0 = arith.constant 0 : index
    %c0_0 = arith.constant 0 : index
    %0 = vector.load %arg1[%c0, %c0_0] : memref<32x32xbf16, #tpu.memory_space<vmem>>, vector<32x32xbf16>
    %c0_1 = arith.constant 0 : index
    %c0_2 = arith.constant 0 : index
    %1 = vector.load %arg2[%c0_1, %c0_2] : memref<32x64xbf16, #tpu.memory_space<vmem>>, vector<32x64xbf16>
    %cst = arith.constant dense<0.000000e+00> : vector<32x64xf32>
    %2 = tpu.matmul %0, %1, %cst {dimension_numbers = #tpu.dot_dimension_numbers<[1], [0], [0], [1], [0, 0, 1, 1], [], []>} : vector<32x32xbf16>, vector<32x64xbf16>, vector<32x64xf32> -> vector<32x64xf32>
    %c0_3 = arith.constant 0 : index
    %c0_4 = arith.constant 0 : index
    %3 = vector.load %arg3[%c0_3, %c0_4] : memref<1x64xf32, #tpu.memory_space<vmem>>, vector<1x64xf32>
    %4 = vector.broadcast %3 : vector<1x64xf32> to vector<32x64xf32>
    %5 = arith.addf %2, %4 : vector<32x64xf32>
    %6 = arith.mulf %5, %5 : vector<32x64xf32>
    %7 = arith.mulf %6, %5 : vector<32x64xf32>
    %cst_5 = arith.constant 5.000000e-01 : f32
    %8 = vector.broadcast %cst_5 : f32 to vector<32x64xf32>
    %9 = arith.mulf %8, %5 : vector<32x64xf32>
    %cst_6 = arith.constant 4.471500e-02 : f32
    %10 = vector.broadcast %cst_6 : f32 to vector<32x64xf32>
    %11 = arith.mulf %10, %7 : vector<32x64xf32>
    %12 = arith.addf %5, %11 : vector<32x64xf32>
    %cst_7 = arith.constant 0.797884583 : f32
    %13 = vector.broadcast %cst_7 : f32 to vector<32x64xf32>
    %14 = arith.mulf %13, %12 : vector<32x64xf32>
    %15 = math.tanh %14 : vector<32x64xf32>
    %cst_8 = arith.constant 1.000000e+00 : f32
    %16 = vector.broadcast %cst_8 : f32 to vector<32x64xf32>
    %17 = arith.addf %16, %15 : vector<32x64xf32>
    %18 = arith.mulf %9, %17 : vector<32x64xf32>
    %19 = arith.truncf %18 : vector<32x64xf32> to vector<32x64xbf16>
    %c0_9 = arith.constant 0 : index
    %c0_10 = arith.constant 0 : index
    %20 = vector.load %arg4[%c0_9, %c0_10] : memref<64x32xbf16, #tpu.memory_space<vmem>>, vector<64x32xbf16>
    %cst_11 = arith.constant dense<0.000000e+00> : vector<32x32xf32>
    %21 = tpu.matmul %19, %20, %cst_11 {dimension_numbers = #tpu.dot_dimension_numbers<[1], [0], [0], [1], [0, 0, 1, 1], [], []>} : vector<32x64xbf16>, vector<64x32xbf16>, vector<32x32xf32> -> vector<32x32xf32>
    %c0_12 = arith.constant 0 : index
    %c0_13 = arith.constant 0 : index
    %22 = vector.load %arg5[%c0_12, %c0_13] : memref<1x32xf32, #tpu.memory_space<vmem>>, vector<1x32xf32>
    %23 = vector.broadcast %22 : vector<1x32xf32> to vector<32x32xf32>
    %24 = arith.addf %21, %23 : vector<32x32xf32>
    %c0_14 = arith.constant 0 : index
    %c0_15 = arith.constant 0 : index
    %25 = vector.load %arg6[%c0_14, %c0_15] : memref<32x32xf32, #tpu.memory_space<vmem>>, vector<32x32xf32>
    tpu.vector_store %arg6[%c0_14, %c0_15], %24 {strides = array<i32>} : memref<32x32xf32, #tpu.memory_space<vmem>>, vector<32x32xf32>,
    return
  }
  func.func @transform_0(%arg0: i32) -> (i32, i32) {
    %c0_i32 = arith.constant 0 : i32
    %c0_i32_0 = arith.constant 0 : i32
    return %arg0, %c0_i32 : i32, i32
  }
  func.func @transform_1(%arg0: i32) -> (i32, i32) {
    %c0_i32 = arith.constant 0 : i32
    %c0_i32_0 = arith.constant 0 : i32
    %c0_i32_1 = arith.constant 0 : i32
    return %c0_i32, %c0_i32_0 : i32, i32
  }
  func.func @transform_2(%arg0: i32) -> (i32, i32) {
    %c0_i32 = arith.constant 0 : i32
    %c0_i32_0 = arith.constant 0 : i32
    %c0_i32_1 = arith.constant 0 : i32
    return %c0_i32, %c0_i32_0 : i32, i32
  }
  func.func @transform_3(%arg0: i32) -> (i32, i32) {
    %c0_i32 = arith.constant 0 : i32
    %c0_i32_0 = arith.constant 0 : i32
    %c0_i32_1 = arith.constant 0 : i32
    return %c0_i32, %c0_i32_0 : i32, i32
  }
  func.func @transform_4(%arg0: i32) -> (i32, i32) {
    %c0_i32 = arith.constant 0 : i32
    %c0_i32_0 = arith.constant 0 : i32
    %c0_i32_1 = arith.constant 0 : i32
    return %c0_i32, %c0_i32_0 : i32, i32
  }
  func.func @transform_5(%arg0: i32) -> (i32, i32) {
    %c0_i32 = arith.constant 0 : i32
    %c0_i32_0 = arith.constant 0 : i32
    return %arg0, %c0_i32 : i32, i32
  }
}

</mosaic_0001>

<llo_original>
// kernel: chunk_forward.1
$region0: #{chunk_forward.1}
  #allocation0 [shape = 'u32[]', space=smem, size = 0x4, offset = 0x4, fixed_abs, tag = 'smem constant byte address 0x4 - core index']
  #allocation1 [shape = 'u32[144,128]{1,0:T(1,128)}', space=vmem, size = 0x12000, scoped, tag = 'internal scratch']
  %s0 = inlined_call_operand.vmem [shape: bf16[32,32], index: 0, kind: input, shape index: {}]
  %s1 = inlined_call_operand.vmem [shape: bf16[32,64], index: 1, kind: input, shape index: {}]
  %s2 = inlined_call_operand.vmem [shape: f32[1,64], index: 2, kind: input, shape index: {}]
  %s3 = inlined_call_operand.vmem [shape: bf16[64,32], index: 3, kind: input, shape index: {}]
  %s4 = inlined_call_operand.vmem [shape: f32[1,32], index: 4, kind: input, shape index: {}]
  %s5 = inlined_call_operand.hbm [shape: f32[32,32], index: 5, kind: output, shape index: {}]
  %s6 = sld [smem:[#allocation0]]
  $region30: #{chunk_forward.1} parent=0
    _
  %s8 = ssub.s32 1, %s6
  %s9 = scalar_select 0, %s8, %s6
  $region1: #{chunk_forward.1} parent=0
    #allocation2 [shape = 'u8[16384]{0}', space=vmem, size = 0x4000, scoped, tag = 'output window, operand 0, single buffered']
    #allocation3 [shape = 's32[1]{0}', space=sflag, size = 0x4, scoped, tag = 'scoped memory for chunk_forward.1']
    %10 = vsyncpa [#allocation3], 0
    // Predicated region
    $region2: #{chunk_forward.1} parent=1 // pred_check
      _
    $region3: #{chunk_forward.1} parent=1 // pred_check_branch
      %12 = sbr.rel (0) target = $region5
    $region4: #{chunk_forward.1} parent=1 // pred_region
      _
    $region5: #{chunk_forward.1} parent=1 // pred_fallthru
      _
    // Predicated region
    $region6: #{chunk_forward.1} parent=1 // pred_check
      _
    $region7: #{chunk_forward.1} parent=1 // pred_check_branch
      %14 = sbr.rel (0) target = $region9
    $region8: #{chunk_forward.1} parent=1 // pred_region
      _
    $region9: #{chunk_forward.1} parent=1 // pred_fallthru
      _
    // Predicated region
    $region10: #{chunk_forward.1} parent=1 // pred_check
      _
    $region11: #{chunk_forward.1} parent=1 // pred_check_branch
      %16 = sbr.rel (0) target = $region13
    $region12: #{chunk_forward.1} parent=1 // pred_region
      _
    $region13: #{chunk_forward.1} parent=1 // pred_fallthru
      _
    // Predicated region
    $region14: #{chunk_forward.1} parent=1 // pred_check
      _
    $region15: #{chunk_forward.1} parent=1 // pred_check_branch
      %18 = sbr.rel (0) target = $region17
    $region16: #{chunk_forward.1} parent=1 // pred_region
      _
    $region17: #{chunk_forward.1} parent=1 // pred_fallthru
      _
    // Predicated region
    $region18: #{chunk_forward.1} parent=1 // pred_check
      _
    $region19: #{chunk_forward.1} parent=1 // pred_check_branch
      %20 = sbr.rel (0) target = $region21
    $region20: #{chunk_forward.1} parent=1 // pred_region
      _
    $region21: #{chunk_forward.1} parent=1 // pred_fallthru
      _
    %v22 = vld [vmem:[%s0] sm:$0xf]
    %v23 = vld [vmem:[%s0 + $0x4] sm:$0xf]
    %v24 = vld [vmem:[%s0 + $0x8] sm:$0xf]
    %v25 = vld [vmem:[%s0 + $0xc] sm:$0xf]
    %v26 = vld [vmem:[%s1] sm:$0xf]
    %v27 = vld [vmem:[%s1 + $0x4] sm:$0xf]
    %v28 = vld [vmem:[%s1 + $0x8] sm:$0xf]
    %v29 = vld [vmem:[%s1 + $0xc] sm:$0xf]
    %v30 = vld [vmem:[%s2] sm:$0x1]
    %v32 = vlaneseq
    %v33 = vshrl.u32 %v32, 7
    %v34 = vsub.s32 0, %v33
    %v35 = vrot.slane %v30, %v34
    %v41 = vunpack.c.l.b16 %v22
    %v42 = vunpack.c.l.b16 %v23
    %v43 = vunpack.c.l.b16 %v24
    %v44 = vunpack.c.l.b16 %v25
    %v45 = vpack.c.b16 %v42, %v41
    %v46 = vpack.c.b16 %v44, %v43
    %v51 = vunpack.c.l.b16 %v26
    %v52 = vunpack.c.l.b16 %v27
    %v53 = vunpack.c.l.b16 %v28
    %v54 = vunpack.c.l.b16 %v29
    %v55 = vpack.c.b16 %v52, %v51
    %v56 = vpack.c.b16 %v54, %v53
    %vm59 = vcmask 261120
    %v61 = vsel %vm59, %v45, 0
    %v64 = vsel %vm59, %v46, 0
    %66 = vmatprep.subr.bf16.mxu0 0
    %67 = vmatpush1.bf16.msra.mxu0 %v55
    %68 = vmatprep.subr.bf16.mxu0 0
    %69 = vmatpush1.bf16.msra.mxu0 %v56
    %70 = vmatprep.subr.bf16.mxu0 0
    %71 = vmatpush1.bf16.msra.mxu0 0
    %72 = vmatprep.subr.bf16.mxu0 0
    %73 = vmatpush1.bf16.msra.mxu0 0
    %74 = vmatprep.subr.bf16.mxu0 0
    %75 = vmatpush1.bf16.msra.mxu0 0
    %76 = vmatprep.subr.bf16.mxu0 0
    %77 = vmatpush1.bf16.msra.mxu0 0
    %78 = vmatprep.subr.bf16.mxu0 0
    %79 = vmatpush1.bf16.msra.mxu0 0
    %80 = vmatprep.subr.bf16.mxu0 0
    %81 = vmatpush1.bf16.msra.mxu0 0
    %82 = vmatprep.subr.bf16.mxu0 0
    %83 = vmatpush1.bf16.msra.mxu0 0
    %84 = vmatprep.subr.bf16.mxu0 0
    %85 = vmatpush1.bf16.msra.mxu0 0
    %86 = vmatprep.subr.bf16.mxu0 0
    %87 = vmatpush1.bf16.msra.mxu0 0
    %88 = vmatprep.subr.bf16.mxu0 0
    %89 = vmatpush1.bf16.msra.mxu0 0
    %90 = vmatprep.subr.bf16.mxu0 0
    %91 = vmatpush1.bf16.msra.mxu0 0
    %92 = vmatprep.subr.bf16.mxu0 0
    %93 = vmatpush1.bf16.msra.mxu0 0
    %94 = vmatprep.subr.bf16.mxu0 0
    %95 = vmatpush1.bf16.msra.mxu0 0
    %96 = vmatprep.subr.bf16.mxu0 0
    %97 = vmatpush1.bf16.msra.mxu0 0
    %98 = vmatprep.mubr.bf16.mxu0 0
    %99 = vmatmul.mubr.bf16.gmra.mrb[0].mxu0 %v61
    %v100 = vpop.f32.mrb[0].mxu0
    %v101 = vadd.f32 %v35, %v100
    %v102 = vpop.f32.mrb[0].mxu0
    %v103 = vpop.f32.mrb[0].mxu0
    %v104 = vadd.f32 %v35, %v103
    %v105 = vpop.f32.mrb[0].mxu0
    %106 = vmatprep.mubr.bf16.mxu0 0
    %107 = vmatmul.mubr.bf16.gmra.mrb[0].mxu0 %v64
    %v108 = vpop.f32.mrb[0].mxu0
    %v109 = vadd.f32 %v35, %v108
    %v110 = vpop.f32.mrb[0].mxu0
    %v111 = vpop.f32.mrb[0].mxu0
    %v112 = vadd.f32 %v35, %v111
    %v113 = vpop.f32.mrb[0].mxu0
    %114 = vdwg.mxu0
    %v115 = vmul.f32 %v101, %v101
    %v116 = vmul.f32 %v104, %v104
    %v117 = vmul.f32 %v109, %v109
    %v118 = vmul.f32 %v112, %v112
    %v119 = vmul.f32 %v115, %v101
    %v120 = vmul.f32 %v116, %v104
    %v121 = vmul.f32 %v117, %v109
    %v122 = vmul.f32 %v118, %v112
    %v123 = vmul.f32 %v101, 0.5
    %v124 = vmul.f32 %v104, 0.5
    %v125 = vmul.f32 %v109, 0.5
    %v126 = vmul.f32 %v112, 0.5
    %v127 = vmul.f32 %v119, 0.044715
    %v128 = vmul.f32 %v120, 0.044715
    %v129 = vmul.f32 %v121, 0.044715
    %v130 = vmul.f32 %v122, 0.044715
    %v131 = vadd.f32 %v101, %v127
    %v132 = vadd.f32 %v104, %v128
    %v133 = vadd.f32 %v109, %v129
    %v134 = vadd.f32 %v112, %v130
    %v135 = vmul.f32 %v131, 0.7978846
    %v136 = vmul.f32 %v132, 0.7978846
    %v137 = vmul.f32 %v133, 0.7978846
    %v138 = vmul.f32 %v134, 0.7978846
    %v139 = vtanh.pop %v135
    %v140 = vtanh.pop %v136
    %v141 = vtanh.pop %v137
    %v142 = vtanh.pop %v138
    %v143 = vadd.f32 %v139, 1.0
    %v144 = vadd.f32 %v140, 1.0
    %v145 = vadd.f32 %v141, 1.0
    %v146 = vadd.f32 %v142, 1.0
    %v147 = vmul.f32 %v123, %v143
    %v148 = vmul.f32 %v124, %v144
    %v149 = vmul.f32 %v125, %v145
    %v150 = vmul.f32 %v126, %v146
    %v151 = vpack.c.bf16 %v148, %v147
    %v152 = vpack.c.bf16 %v150, %v149
    %v153 = vld [vmem:[%s3] sm:$0xf]
    %v154 = vld [vmem:[%s3 + $0x4] sm:$0xf]
    %v155 = vld [vmem:[%s3 + $0x8] sm:$0xf]
    %v156 = vld [vmem:[%s3 + $0xc] sm:$0xf]
    %v157 = vld [vmem:[%s3 + $0x10] sm:$0xf]
    %v158 = vld [vmem:[%s3 + $0x14] sm:$0xf]
    %v159 = vld [vmem:[%s3 + $0x18] sm:$0xf]
    %v160 = vld [vmem:[%s3 + $0x1c] sm:$0xf]
    %v161 = vld [vmem:[%s4] sm:$0x1]
    %v163 = vlaneseq
    %v164 = vshrl.u32 %v163, 7
    %v165 = vsub.s32 0, %v164
    %v166 = vrot.slane %v161, %v165
    %v176 = vunpack.c.l.b16 %v153
    %v177 = vunpack.c.l.b16 %v154
    %v178 = vunpack.c.l.b16 %v155
    %v179 = vunpack.c.l.b16 %v156
    %v180 = vunpack.c.l.b16 %v157
    %v181 = vunpack.c.l.b16 %v158
    %v182 = vunpack.c.l.b16 %v159
    %v183 = vunpack.c.l.b16 %v160
    %v184 = vpack.c.b16 %v177, %v176
    %v185 = vpack.c.b16 %v179, %v178
    %v186 = vpack.c.b16 %v181, %v180
    %v187 = vpack.c.b16 %v183, %v182
    %vm192 = vcmask 523264
    %v194 = vsel %vm192, %v151, 0
    %v197 = vsel %vm192, %v152, 0
    %199 = vmatprep.subr.bf16.mxu0 0
    %200 = vmatpush1.bf16.msra.mxu0 %v184
    %201 = vmatprep.subr.bf16.mxu0 0
    %202 = vmatpush1.bf16.msra.mxu0 %v185
    %203 = vmatprep.subr.bf16.mxu0 0
    %204 = vmatpush1.bf16.msra.mxu0 %v186
    %205 = vmatprep.subr.bf16.mxu0 0
    %206 = vmatpush1.bf16.msra.mxu0 %v187
    %207 = vmatprep.subr.bf16.mxu0 0
    %208 = vmatpush1.bf16.msra.mxu0 0
    %209 = vmatprep.subr.bf16.mxu0 0
    %210 = vmatpush1.bf16.msra.mxu0 0
    %211 = vmatprep.subr.bf16.mxu0 0
    %212 = vmatpush1.bf16.msra.mxu0 0
    %213 = vmatprep.subr.bf16.mxu0 0
    %214 = vmatpush1.bf16.msra.mxu0 0
    %215 = vmatprep.subr.bf16.mxu0 0
    %216 = vmatpush1.bf16.msra.mxu0 0
    %217 = vmatprep.subr.bf16.mxu0 0
    %218 = vmatpush1.bf16.msra.mxu0 0
    %219 = vmatprep.subr.bf16.mxu0 0
    %220 = vmatpush1.bf16.msra.mxu0 0
    %221 = vmatprep.subr.bf16.mxu0 0
    %222 = vmatpush1.bf16.msra.mxu0 0
    %223 = vmatprep.subr.bf16.mxu0 0
    %224 = vmatpush1.bf16.msra.mxu0 0
    %225 = vmatprep.subr.bf16.mxu0 0
    %226 = vmatpush1.bf16.msra.mxu0 0
    %227 = vmatprep.subr.bf16.mxu0 0
    %228 = vmatpush1.bf16.msra.mxu0 0
    %229 = vmatprep.subr.bf16.mxu0 0
    %230 = vmatpush1.bf16.msra.mxu0 0
    %231 = vmatprep.mubr.bf16.mxu0 0
    %232 = vmatmul.mubr.bf16.gmra.mrb[0].mxu0 %v194
    %v233 = vpop.f32.mrb[0].mxu0
    %v234 = vadd.f32 %v166, %v233
    %v235 = vpop.f32.mrb[0].mxu0
    %v236 = vpop.f32.mrb[0].mxu0
    %v237 = vadd.f32 %v166, %v236
    %v238 = vpop.f32.mrb[0].mxu0
    %239 = vmatprep.mubr.bf16.mxu0 0
    %240 = vmatmul.mubr.bf16.gmra.mrb[0].mxu0 %v197
    %v241 = vpop.f32.mrb[0].mxu0
    %v242 = vadd.f32 %v166, %v241
    %v243 = vpop.f32.mrb[0].mxu0
    %v244 = vpop.f32.mrb[0].mxu0
    %v245 = vadd.f32 %v166, %v244
    %v246 = vpop.f32.mrb[0].mxu0
    %247 = vdwg.mxu0
    %248 = vst.msk [vmem:[#allocation2] sm:$0xff] %vm59, %v234
    %249 = vst.msk [vmem:[#allocation2 + $0x8] sm:$0xff] %vm59, %v237
    %250 = vst.msk [vmem:[#allocation2 + $0x10] sm:$0xff] %vm59, %v242
    %251 = vst.msk [vmem:[#allocation2 + $0x18] sm:$0xff] %vm59, %v245
    // Predicated region
    $region22: #{chunk_forward.1} parent=1 // pred_check
      _
    $region23: #{chunk_forward.1} parent=1 // pred_check_branch
      %253 = sbr.rel (0) target = $region25
    $region24: #{chunk_forward.1} parent=1 // pred_region
      %s255 = ssub.s32 512, 512
      %256 = vsyncadd [#allocation3], %s255
      %s257 = sshll.u32 [#allocation2], 4
      %s258 = int_to_ptr.vmem [resolvable:$true] %s257
      %263 = dma.vmem_to_hbm [thread:$0]  %s258, 512, %s5, [#allocation3], 128, 128, 8
    $region25: #{chunk_forward.1} parent=1 // pred_fallthru
      _
    // Predicated region
    $region26: #{chunk_forward.1} parent=1 // pred_check
      _
    $region27: #{chunk_forward.1} parent=1 // pred_check_branch
      %265 = sbr.rel (0) target = $region29
    $region28: #{chunk_forward.1} parent=1 // pred_region
      %266 = dma.done [#allocation3], 512
    $region29: #{chunk_forward.1} parent=1 // pred_fallthru
      _
    %267 = vsyncpa [#allocation3], 1

</llo_original>
